<compile_context>
chip_gen: v6e
topology: v6e:2x2x1
jax: 0.10.0
libtpu: 0.0.40
codegen_flags: <defaults>
</compile_context>

<pallas_src>
import jax
import jax.numpy as jnp
from jax.experimental import pallas as pl
from jax.experimental.pallas import tpu as pltpu


def _readout_kernel(w_ref, seq1_ref, wt_ref, v_ref, c_acc):
    """Grid = (B, N_tiles); node axis is the (arbitrary) reduction axis.

    w_ref    : (TN, 1)  f32   normalized readout weights (msk/sum(msk) or 1/N; 0 pad)
    seq1_ref : (TN, F)  bf16  positive node-feature tile
    wt_ref   : (F, F)   bf16  bilinear weight transposed (W^T), grid-resident
    v_ref    : (F, 1)   f32   output: v = W @ sigmoid(readout), one per batch elem
    c_acc    : (1, F)   f32   VMEM scratch: running weighted readout sum
    """
    t = pl.program_id(1)

    @pl.when(t == 0)
    def _():
        c_acc[...] = jnp.zeros_like(c_acc)

    # VPU weighted sublane-reduction (f32 accumulation); keeps the MXU free and
    # hides under the seq1 DMA.
    x = seq1_ref[...].astype(jnp.float32)                        # (TN, F)
    c_acc[...] += jnp.sum(x * w_ref[...], axis=0, keepdims=True)  # (1, F)

    @pl.when(t == pl.num_programs(1) - 1)
    def _():
        c = jax.nn.sigmoid(c_acc[...])                            # (1, F) f32, EUP
        v = jnp.dot(c.astype(jnp.bfloat16), wt_ref[...],
                    preferred_element_type=jnp.float32)           # (1, F) == (W @ c)^T
        v_ref[...] = jnp.transpose(v)                             # (F, 1)


def _score_body(v_ref, seq1_ref, seq2_ref, out_ref, b0, bias):
    """Score one node tile against the per-batch summary vector v.

    v_ref    : (F, 1)   f32   v = W @ sigmoid(readout)
    seq*_ref : (TN, F)  bf16  node-feature tiles
    out_ref  : (2, TN)  f32   row 0 = sc1 tile, row 1 = sc2 tile (lane-dense)
    b0       : scalar   f32   bilinear bias
    bias     : (2, TN)  f32 or None   optional sampling biases
    """
    v_col = v_ref[...].astype(jnp.bfloat16)                               # (F, 1)
    sc1 = jnp.dot(seq1_ref[...], v_col, preferred_element_type=jnp.float32)  # (TN,1)
    sc2 = jnp.dot(seq2_ref[...], v_col, preferred_element_type=jnp.float32)  # (TN,1)
    scores = jnp.concatenate([jnp.transpose(sc1), jnp.transpose(sc2)], axis=0)
    scores = scores + b0                                                   # (2, TN)
    if bias is not None:
        scores = scores + bias
    out_ref[...] = scores                                                  # one store


def _make_score_kernel(has_samp_bias):
    if has_samp_bias:
        def kernel(b0_ref, v_ref, s1_ref, s2_ref, bias_ref, out_ref):
            _score_body(v_ref, s1_ref, s2_ref, out_ref, b0_ref[0, 0], bias_ref[...])
    else:
        def kernel(b0_ref, v_ref, s1_ref, s2_ref, out_ref):
            _score_body(v_ref, s1_ref, s2_ref, out_ref, b0_ref[0, 0], None)
    return kernel


def dgi_sig_forward(seq1, seq2, bilinear_w, bilinear_b,
                    msk=None, samp_bias1=None, samp_bias2=None, sparse=None):
    """Fused DGI_Sig forward.  Returns logits of shape (B, 2*N).

    bilinear_w : (F, F)   == nn.Bilinear(F, F, 1).weight[0]
    bilinear_b : (1,) / scalar == nn.Bilinear bias
    msk        : optional (B, N) readout mask
    samp_bias* : optional (B, N) additive sample biases
    sparse     : unused by DGI_Sig.forward (kept for signature parity)
    """
    del sparse
    B, N, F = seq1.shape
    f32 = jnp.float32

    # ---- node-axis tiling: ~2 MiB bf16 tiles so 2 seqs x 2 pipeline buffers ----
    # stay well under every generation's scoped-VMEM budget (v5e 16 MiB default,
    # v7x 64 MiB physical).
    TARGET_TILE_BYTES = 2 * 1024 * 1024
    tn_cap = max(128, (TARGET_TILE_BYTES // (F * 2)) // 128 * 128)
    if N <= tn_cap:
        TN, NT, Np = N, 1, N                 # single tile: no node padding at all
    else:
        TN = tn_cap                          # multiple of 128 -> lane-dense stores
        NT = -(-N // TN)
        Np = NT * TN

    # ---- readout weights (reproduces AvgReadout exactly; global mask sum) -----
    if msk is None:
        w = jnp.full((B, N, 1), 1.0 / N, dtype=f32)
    else:
        m = msk.astype(f32)
        w = (m / jnp.sum(m))[..., None]
    if Np != N:
        w = jnp.pad(w, ((0, 0), (0, Np - N), (0, 0)))

    # ---- feature streams: bf16, node-padded only when tiled, NO feature pad ---
    def prep(x):
        xb = x.astype(jnp.bfloat16)
        if Np != N:
            xb = jnp.pad(xb, ((0, 0), (0, Np - N), (0, 0)))
        return xb

    seq1_b = prep(seq1)
    seq2_b = prep(seq2)

    wt = jnp.transpose(jnp.asarray(bilinear_w, f32)).astype(jnp.bfloat16)  # W^T (F,F)
    b0 = jnp.asarray(bilinear_b, f32).reshape(-1)[0].reshape(1, 1)         # SMEM scalar

    # ---- VMEM budget (explicit so v5e's 16 MiB default never bites) -----------
    f_pad = -(-F // 128) * 128
    vmem_est = (4 * TN * F * 2            # score kernel: 2 seqs x 2 buffers (bf16)
                + 2 * F * F * 2           # readout kernel: W^T double-buffered
                + 2 * TN * F * 4          # f32 intermediates of the readout reduce
                + 4 * 2 * TN * 4 * 2      # (2,TN) out/bias tiles, double-buffered
                + 8 * f_pad * 4           # c_acc scratch (padded)
                + (2 << 20))              # headroom
    vmem_limit = int(min(max(vmem_est, 32 << 20), 64 << 20))

    # ---- pass 1: readout -> sigmoid -> v = W @ c (streams seq1 only) ----------
    v = pl.pallas_call(
        _readout_kernel,
        out_shape=jax.ShapeDtypeStruct((B, F, 1), f32),
        grid=(B, NT),
        in_specs=[
            pl.BlockSpec((None, TN, 1), lambda b, t: (b, t, 0)),   # readout weights
            pl.BlockSpec((None, TN, F), lambda b, t: (b, t, 0)),   # seq1 tiles (bf16)
            pl.BlockSpec((F, F), lambda b, t: (0, 0)),             # W^T, grid-resident
        ],
        out_specs=pl.BlockSpec((None, F, 1), lambda b, t: (b, 0, 0)),
        scratch_shapes=[pltpu.VMEM((1, F), f32)],
        compiler_params=pltpu.CompilerParams(
            dimension_semantics=("parallel", "arbitrary"),
            vmem_limit_bytes=vmem_limit),
    )(w, seq1_b, wt)

    # ---- pass 2: stream seq1/seq2 node tiles, score against v -----------------
    has_samp = (samp_bias1 is not None) or (samp_bias2 is not None)
    score_kernel = _make_score_kernel(has_samp)

    in_specs = [
        pl.BlockSpec(memory_space=pltpu.MemorySpace.SMEM),         # bilinear bias b0
        pl.BlockSpec((None, F, 1), lambda b, t: (b, 0, 0)),        # v (per batch)
        pl.BlockSpec((None, TN, F), lambda b, t: (b, t, 0)),       # seq1 tiles (bf16)
        pl.BlockSpec((None, TN, F), lambda b, t: (b, t, 0)),       # seq2 tiles (bf16)
    ]
    args = [b0, v, seq1_b, seq2_b]
    if has_samp:
        bias = jnp.zeros((B, 2, Np), f32)
        if samp_bias1 is not None:
            bias = bias.at[:, 0, :N].set(samp_bias1.astype(f32))
        if samp_bias2 is not None:
            bias = bias.at[:, 1, :N].set(samp_bias2.astype(f32))
        in_specs.append(pl.BlockSpec((None, 2, TN), lambda b, t: (b, 0, t)))
        args.append(bias)

    out = pl.pallas_call(
        score_kernel,
        out_shape=jax.ShapeDtypeStruct((B, 2, Np), f32),
        grid=(B, NT),
        in_specs=in_specs,
        out_specs=pl.BlockSpec((None, 2, TN), lambda b, t: (b, 0, t)),
        compiler_params=pltpu.CompilerParams(
            dimension_semantics=("parallel", "parallel"),
            vmem_limit_bytes=vmem_limit),
    )(*args)

    # (B, 2, Np) -> (B, 2N): drop node padding, flatten the concat axis.
    return out[:, :, :N].reshape(B, 2 * N)


def dgi_sig_reference(seq1, seq2, bilinear_w, bilinear_b,
                      msk=None, samp_bias1=None, samp_bias2=None):
    """Pure-JAX f32 reference matching the PyTorch module."""
    if msk is None:
        c = jnp.mean(seq1, axis=1)
    else:
        m = msk[..., None].astype(seq1.dtype)
        c = jnp.sum(seq1 * m, axis=1) / jnp.sum(m)
    c = jax.nn.sigmoid(c)                                    # (B, F)
    b0 = jnp.asarray(bilinear_b, jnp.float32).reshape(-1)[0]
    v = c @ bilinear_w.T                                     # (B, F) == (W @ c)^T
    sc1 = jnp.einsum("bnf,bf->bn", seq1, v) + b0
    sc2 = jnp.einsum("bnf,bf->bn", seq2, v) + b0
    if samp_bias1 is not None:
        sc1 = sc1 + samp_bias1
    if samp_bias2 is not None:
        sc2 = sc2 + samp_bias2
    return jnp.concatenate([sc1, sc2], axis=1)


if __name__ == "__main__":
    key = jax.random.PRNGKey(0)
    B, N, F = 2, 200, 96          # small; intentionally not multiples of (8, 128)
    ks = jax.random.split(key, 7)
    seq1 = jax.random.normal(ks[0], (B, N, F), dtype=jnp.float32)
    seq2 = jax.random.normal(ks[1], (B, N, F), dtype=jnp.float32)
    bil_w = jax.random.normal(ks[2], (F, F), dtype=jnp.float32) / jnp.sqrt(F)
    bil_b = jax.random.normal(ks[3], (1,), dtype=jnp.float32)
    samp_bias1 = 0.1 * jax.random.normal(ks[4], (B, N), dtype=jnp.float32)
    samp_bias2 = 0.1 * jax.random.normal(ks[5], (B, N), dtype=jnp.float32)
    msk = (jax.random.uniform(ks[6], (B, N)) > 0.3).astype(jnp.float32)

    # Path 1: no mask, with sampling biases (exercises the bias-tile score kernel).
    out1 = jax.block_until_ready(dgi_sig_forward(
        seq1, seq2, bil_w, bil_b, msk=None,
        samp_bias1=samp_bias1, samp_bias2=samp_bias2))
    assert out1.shape == (B, 2 * N), out1.shape
    ref1 = dgi_sig_reference(seq1, seq2, bil_w, bil_b, msk=None,
                             samp_bias1=samp_bias1, samp_bias2=samp_bias2)
    err1 = float(jnp.linalg.norm(out1 - ref1) / (jnp.linalg.norm(ref1) + 1e-12))
    assert err1 < 2e-2, f"path1 relative error too large: {err1}"

    # Path 2: masked readout, no sampling biases (exercises the SMEM-scalar kernel).
    out2 = jax.block_until_ready(dgi_sig_forward(seq1, seq2, bil_w, bil_b, msk=msk))
    assert out2.shape == (B, 2 * N), out2.shape
    ref2 = dgi_sig_reference(seq1, seq2, bil_w, bil_b, msk=msk)
    err2 = float(jnp.linalg.norm(out2 - ref2) / (jnp.linalg.norm(ref2) + 1e-12))
    assert err2 < 2e-2, f"path2 relative error too large: {err2}"

    print("KERNEL_OK")
</pallas_src>

<mosaic_0001>
module attributes {stable_mosaic.version = 11 : i64} {
  func.func @_readout_kernel(%arg0: i32, %arg1: i32, %arg2: memref<1x200x1xf32, #tpu.memory_space<vmem>>, %arg3: memref<1x200x96xbf16, #tpu.memory_space<vmem>>, %arg4: memref<96x96xbf16, #tpu.memory_space<vmem>>, %arg5: memref<1x96x1xf32, #tpu.memory_space<vmem>>, %arg6: memref<1x96xf32, #tpu.memory_space<vmem>>) attributes {dimension_semantics = [#tpu.dimension_semantics<parallel>, #tpu.dimension_semantics<arbitrary>], iteration_bounds = array<i64: 2, 1>, scalar_prefetch = 0 : i64, scratch_operands = 1 : i64, tpu.core_type = #tpu.core_type<tc>, window_params = [{transform_indices = @transform_0, window_bounds = array<i64: 1, 200, 1>}, {transform_indices = @transform_1, window_bounds = array<i64: 1, 200, 96>}, {pipeline_mode = #tpu.pipeline_mode<synchronous>, transform_indices = @transform_2, window_bounds = array<i64: 96, 96>}, {transform_indices = @transform_3, window_bounds = array<i64: 1, 96, 1>}]} {
    %c0_i32 = arith.constant 0 : i32
    %0 = arith.cmpi eq, %arg1, %c0_i32 : i32
    %1 = arith.extui %0 : i1 to i32
    %c0_i32_0 = arith.constant 0 : i32
    %2 = arith.cmpi ne, %1, %c0_i32_0 : i32
    scf.if %2 {
      %cst_12 = arith.constant 0.000000e+00 : f32
      %18 = vector.broadcast %cst_12 : f32 to vector<1x96xf32>
      %c0_13 = arith.constant 0 : index
      %c0_14 = arith.constant 0 : index
      %19 = vector.load %arg6[%c0_13, %c0_14] : memref<1x96xf32, #tpu.memory_space<vmem>>, vector<1x96xf32>
      tpu.vector_store %arg6[%c0_13, %c0_14], %18 {strides = array<i32>} : memref<1x96xf32, #tpu.memory_space<vmem>>, vector<1x96xf32>,
    } else {
    }
    %c0 = arith.constant 0 : index
    %c0_1 = arith.constant 0 : index
    %c0_2 = arith.constant 0 : index
    %3 = vector.load %arg3[%c0, %c0_1, %c0_2] : memref<1x200x96xbf16, #tpu.memory_space<vmem>>, vector<1x200x96xbf16>
    %4 = vector.shape_cast %3 : vector<1x200x96xbf16> to vector<200x96xbf16>
    %5 = arith.extf %4 : vector<200x96xbf16> to vector<200x96xf32>
    %c0_3 = arith.constant 0 : index
    %c0_4 = arith.constant 0 : index
    %6 = vector.load %arg6[%c0_3, %c0_4] : memref<1x96xf32, #tpu.memory_space<vmem>>, vector<1x96xf32>
    %c0_5 = arith.constant 0 : index
    %c0_6 = arith.constant 0 : index
    %c0_7 = arith.constant 0 : index
    %7 = vector.load %arg2[%c0_5, %c0_6, %c0_7] : memref<1x200x1xf32, #tpu.memory_space<vmem>>, vector<1x200x1xf32>
    %8 = vector.shape_cast %7 : vector<1x200x1xf32> to vector<200x1xf32>
    %9 = vector.broadcast %8 : vector<200x1xf32> to vector<200x96xf32>
    %10 = arith.mulf %5, %9 : vector<200x96xf32>
    %cst = arith.constant dense<0.000000e+00> : vector<96xf32>
    %11 = vector.multi_reduction <add>, %10, %cst [0] : vector<200x96xf32> to vector<96xf32>
    %12 = vector.shape_cast %11 : vector<96xf32> to vector<1x96xf32>
    %13 = arith.addf %6, %12 : vector<1x96xf32>
    %c0_8 = arith.constant 0 : index
    %c0_9 = arith.constant 0 : index
    %14 = vector.load %arg6[%c0_8, %c0_9] : memref<1x96xf32, #tpu.memory_space<vmem>>, vector<1x96xf32>
    tpu.vector_store %arg6[%c0_8, %c0_9], %13 {strides = array<i32>} : memref<1x96xf32, #tpu.memory_space<vmem>>, vector<1x96xf32>,
    %c0_i32_10 = arith.constant 0 : i32
    %15 = arith.cmpi eq, %arg1, %c0_i32_10 : i32
    %16 = arith.extui %15 : i1 to i32
    %c0_i32_11 = arith.constant 0 : i32
    %17 = arith.cmpi ne, %16, %c0_i32_11 : i32
    scf.if %17 {
      %c0_12 = arith.constant 0 : index
      %c0_13 = arith.constant 0 : index
      %18 = vector.load %arg6[%c0_12, %c0_13] : memref<1x96xf32, #tpu.memory_space<vmem>>, vector<1x96xf32>
      %19 = arith.negf %18 : vector<1x96xf32>
      %20 = math.exp %19 : vector<1x96xf32>
      %cst_14 = arith.constant 1.000000e+00 : f32
      %21 = vector.broadcast %cst_14 : f32 to vector<1x96xf32>
      %22 = arith.addf %21, %20 : vector<1x96xf32>
      %23 = arith.divf %21, %22 : vector<1x96xf32>
      %24 = arith.truncf %23 : vector<1x96xf32> to vector<1x96xbf16>
      %c0_15 = arith.constant 0 : index
      %c0_16 = arith.constant 0 : index
      %25 = vector.load %arg4[%c0_15, %c0_16] : memref<96x96xbf16, #tpu.memory_space<vmem>>, vector<96x96xbf16>
      %cst_17 = arith.constant dense<0.000000e+00> : vector<1x96xf32>
      %26 = tpu.matmul %24, %25, %cst_17 {dimension_numbers = #tpu.dot_dimension_numbers<[1], [0], [0], [1], [0, 0, 1, 1], [], []>} : vector<1x96xbf16>, vector<96x96xbf16>, vector<1x96xf32> -> vector<1x96xf32>
      %27 = tpu.transpose %26, [1, 0] : vector<1x96xf32> -> vector<96x1xf32>
      %c0_18 = arith.constant 0 : index
      %c0_19 = arith.constant 0 : index
      %c0_20 = arith.constant 0 : index
      %28 = vector.load %arg5[%c0_18, %c0_19, %c0_20] : memref<1x96x1xf32, #tpu.memory_space<vmem>>, vector<1x96x1xf32>
      %29 = vector.shape_cast %28 : vector<1x96x1xf32> to vector<96x1xf32>
      %30 = vector.shape_cast %27 : vector<96x1xf32> to vector<1x96x1xf32>
      tpu.vector_store %arg5[%c0_18, %c0_19, %c0_20], %30 {strides = array<i32>} : memref<1x96x1xf32, #tpu.memory_space<vmem>>, vector<1x96x1xf32>,
    } else {
    }
    return
  }
  func.func @transform_0(%arg0: i32, %arg1: i32) -> (i32, i32, i32) {
    %c0_i32 = arith.constant 0 : i32
    %c0_i32_0 = arith.constant 0 : i32
    return %arg0, %arg1, %c0_i32 : i32, i32, i32
  }
  func.func @transform_1(%arg0: i32, %arg1: i32) -> (i32, i32, i32) {
    %c0_i32 = arith.constant 0 : i32
    %c0_i32_0 = arith.constant 0 : i32
    return %arg0, %arg1, %c0_i32 : i32, i32, i32
  }
  func.func @transform_2(%arg0: i32, %arg1: i32) -> (i32, i32) {
    %c0_i32 = arith.constant 0 : i32
    %c0_i32_0 = arith.constant 0 : i32
    %c0_i32_1 = arith.constant 0 : i32
    return %c0_i32, %c0_i32_0 : i32, i32
  }
  func.func @transform_3(%arg0: i32, %arg1: i32) -> (i32, i32, i32) {
    %c0_i32 = arith.constant 0 : i32
    %c0_i32_0 = arith.constant 0 : i32
    %c0_i32_1 = arith.constant 0 : i32
    return %arg0, %c0_i32, %c0_i32_0 : i32, i32, i32
  }
}

</mosaic_0001>

<llo_original>
// kernel: tpu_custom_call.1
$region0: #{tpu_custom_call.1}
  #allocation0 [shape = 'u32[]', space=smem, size = 0x4, offset = 0x4, fixed_abs, tag = 'smem constant byte address 0x4 - core index']
  #allocation1 [shape = 'u32[144,128]{1,0:T(1,128)}', space=vmem, size = 0x12000, scoped, tag = 'internal scratch']
  #allocation2 [shape = 'f32[1,96]{1,0:T(1,128)}', space=vmem, size = 0x200, scoped, tag = 'scratch operand']
  %s0 = inlined_call_operand.vmem [shape: f32[2,200,1], index: 0, kind: input, shape index: {}]
  %s1 = inlined_call_operand.vmem [shape: bf16[2,200,96], index: 1, kind: input, shape index: {}]
  %s2 = inlined_call_operand.vmem [shape: bf16[96,96], index: 2, kind: input, shape index: {}]
  %s3 = inlined_call_operand.vmem [shape: f32[2,96,1], index: 3, kind: output, shape index: {}]
  %s4 = sld [smem:[#allocation0]]
  $region53: #{tpu_custom_call.1} parent=0
    _
  %s6 = ssub.s32 1, %s4
  %s7 = scalar_select 0, %s6, %s4
  loop: start=0, step=1, limit=4
  $region2: #{tpu_custom_call.1} parent=0 // loop_pre_header
    _
  $region3: #{tpu_custom_call.1} parent=0 // loop_header
    %s9 = sphi 0, %s13
    %p10 = scmp.ge.s32.totalorder %s9, 4
    %s16 = sphi 0, %s28
    %s17 = sphi 0, %s24
    %s18 = sphi 0, %s16
    %s19 = sphi 0, %s17
    %s20 = sphi 0, %s18
    %s21 = sphi 0, %s19
    %s33 = sphi 0, %s35
    %s36 = sphi 0, %s33
    %s37 = sphi 0, %s36
    %s53 = sphi 0, %s37
    %s61 = sphi 0, %s63
    %s64 = sphi 0, %s61
    %s65 = sphi 0, %s64
    %s81 = sphi 0, %s65
    %s85 = sphi 0, %s85
    %s87 = sphi 0, %s85
    %s88 = sphi 0, %s87
    %s102 = sphi 0, %s88
    %s108 = sphi 0, %s110
    %s111 = sphi 0, %s108
    %s112 = sphi 0, %s111
    %s128 = sphi 0, %s112
  $region4: #{tpu_custom_call.1} parent=0 // loop_header_branch
    %12 = sbr.rel (%p10) target = $region8
  $region5: #{tpu_custom_call.1} parent=0 // loop_body
    %s14 = ssub.s32 %s9, 1
    %s15 = ssub.s32 %s9, 2
    %s22 = sadd.s32 1, %s17
    %p23 = scmp.ge.s32.totalorder %s22, 1
    %s24 = scalar_select %p23, 0, %s22
    %s25 = sadd.s32 1, %s16
    %s26 = scalar_select %p23, %s25, %s16
    %p27 = scmp.ge.s32.totalorder %s26, 2
    %s28 = scalar_select %p27, 0, %s26
    %s29 = ssub.s32 %s16, %s28
    %s30 = ssub.s32 %s17, %s24
    %s31 = sor.u32 %s29, %s30
    %p32 = scmp.eq.s32.totalorder %s31, 0
    %s34 = sadd.s32 %s33, 1
    %s35 = scalar_select %p32, %s33, %s34
    %p38 = pneg %p32
    %p39 = scmp.eq.s32.totalorder %s9, 1
    %p40 = por %p38, %p39
    %p41 = scmp.ne.s32.totalorder %s33, %s36
    %p42 = scmp.eq.s32.totalorder %s9, 0
    %p43 = por %p41, %p42
    %p44 = scmp.ne.s32.totalorder %s33, %s36
    %p45 = scmp.eq.s32.totalorder %s14, 1
    %p46 = por %p44, %p45
    %p47 = scmp.ne.s32.totalorder %s36, %s37
    %p48 = scmp.eq.s32.totalorder %s14, 0
    %p49 = por %p47, %p48
    %p50 = scmp.ne.s32.totalorder %s36, %s37
    %p51 = scmp.eq.s32.totalorder %s15, 1
    %p52 = por %p50, %p51
    %p54 = scmp.ne.s32.totalorder %s37, %s53
    %p55 = scmp.eq.s32.totalorder %s15, 0
    %p56 = por %p54, %p55
    %s57 = ssub.s32 %s16, %s28
    %s58 = ssub.s32 %s17, %s24
    %s59 = sor.u32 %s57, %s58
    %p60 = scmp.eq.s32.totalorder %s59, 0
    %s62 = sadd.s32 %s61, 1
    %s63 = scalar_select %p60, %s61, %s62
    %p66 = pneg %p60
    %p67 = scmp.eq.s32.totalorder %s9, 1
    %p68 = por %p66, %p67
    %p69 = scmp.ne.s32.totalorder %s61, %s64
    %p70 = scmp.eq.s32.totalorder %s9, 0
    %p71 = por %p69, %p70
    %p72 = scmp.ne.s32.totalorder %s61, %s64
    %p73 = scmp.eq.s32.totalorder %s14, 1
    %p74 = por %p72, %p73
    %p75 = scmp.ne.s32.totalorder %s64, %s65
    %p76 = scmp.eq.s32.totalorder %s14, 0
    %p77 = por %p75, %p76
    %p78 = scmp.ne.s32.totalorder %s64, %s65
    %p79 = scmp.eq.s32.totalorder %s15, 1
    %p80 = por %p78, %p79
    %p82 = scmp.ne.s32.totalorder %s65, %s81
    %p83 = scmp.eq.s32.totalorder %s15, 0
    %p84 = por %p82, %p83
    %s86 = sadd.s32 %s85, 1
    %p89 = scmp.eq.s32.totalorder %s9, 1
    %p90 = scmp.ne.s32.totalorder %s85, %s87
    %p91 = scmp.eq.s32.totalorder %s9, 0
    %p92 = por %p90, %p91
    %p93 = scmp.ne.s32.totalorder %s85, %s87
    %p94 = scmp.eq.s32.totalorder %s14, 1
    %p95 = por %p93, %p94
    %p96 = scmp.ne.s32.totalorder %s87, %s88
    %p97 = scmp.eq.s32.totalorder %s14, 0
    %p98 = por %p96, %p97
    %p99 = scmp.ne.s32.totalorder %s87, %s88
    %p100 = scmp.eq.s32.totalorder %s15, 1
    %p101 = por %p99, %p100
    %p103 = scmp.ne.s32.totalorder %s88, %s102
    %p104 = scmp.eq.s32.totalorder %s15, 0
    %p105 = por %p103, %p104
    %s106 = ssub.s32 %s16, %s28
    %p107 = scmp.eq.s32.totalorder %s106, 0
    %s109 = sadd.s32 %s108, 1
    %s110 = scalar_select %p107, %s108, %s109
    %p113 = pneg %p107
    %p114 = scmp.eq.s32.totalorder %s9, 1
    %p115 = por %p113, %p114
    %p116 = scmp.ne.s32.totalorder %s108, %s111
    %p117 = scmp.eq.s32.totalorder %s9, 0
    %p118 = por %p116, %p117
    %p119 = scmp.ne.s32.totalorder %s108, %s111
    %p120 = scmp.eq.s32.totalorder %s14, 1
    %p121 = por %p119, %p120
    %p122 = scmp.ne.s32.totalorder %s111, %s112
    %p123 = scmp.eq.s32.totalorder %s14, 0
    %p124 = por %p122, %p123
    %p125 = scmp.ne.s32.totalorder %s111, %s112
    %p126 = scmp.eq.s32.totalorder %s15, 1
    %p127 = por %p125, %p126
    %p129 = scmp.ne.s32.totalorder %s112, %s128
    %p130 = scmp.eq.s32.totalorder %s15, 0
    %p131 = por %p129, %p130
    %p132 = scmp.le.s32.totalorder 1, %s9
    %p133 = scmp.lt.s32.totalorder %s9, 3
    %p134 = pnand %p132, %p133
    %p135 = pneg %p134
    // Predicated region
    $region9: #{tpu_custom_call.1} parent=5 // pred_check
      _
    $region10: #{tpu_custom_call.1} parent=5 // pred_check_branch
      %137 = sbr.rel (%p134) target = $region12
    $region11: #{tpu_custom_call.1} parent=5 // pred_region
      %s138 = ssub.s32 %s9, 1
      // Predicated region
      $region13: #{tpu_custom_call.1} parent=11 // pred_check
        %p139 = pneg %p98
      $region14: #{tpu_custom_call.1} parent=11 // pred_check_branch
        %141 = sbr.rel (%p139) target = $region16
      $region15: #{tpu_custom_call.1} parent=11 // pred_region
        _
      $region16: #{tpu_custom_call.1} parent=11 // pred_fallthru
        _
    $region12: #{tpu_custom_call.1} parent=5 // pred_fallthru
      _
    %p142 = scmp.lt.s32.totalorder %s9, 2
    // Predicated region
    $region17: #{tpu_custom_call.1} parent=5 // pred_check
      %p143 = pneg %p142
    $region18: #{tpu_custom_call.1} parent=5 // pred_check_branch
      %145 = sbr.rel (%p143) target = $region20
    $region19: #{tpu_custom_call.1} parent=5 // pred_region
      // Predicated region
      $region21: #{tpu_custom_call.1} parent=19 // pred_check
        %p146 = pneg %p43
      $region22: #{tpu_custom_call.1} parent=19 // pred_check_branch
        %148 = sbr.rel (%p146) target = $region24
      $region23: #{tpu_custom_call.1} parent=19 // pred_region
        %s149 = smul.u32 25, %s17
        %p150 = scmp.lt.s32.totalorder %s16, 1
        %s151 = scalar_select %p150, %s16, 1
        %p152 = scmp.lt.s32.totalorder %s149, 24
        %s153 = scalar_select %p152, %s149, 24
        %s154 = smul.addr %s151, 25
        %s155 = sadd.s32 %s153, %s154
        %s156 = smul.addr %s155, 8
        %s157 = scalar_lea.vmem %s0, %s156
        %s158 = smul.u32 25, %s17
      $region24: #{tpu_custom_call.1} parent=19 // pred_fallthru
        _
      // Predicated region
      $region25: #{tpu_custom_call.1} parent=19 // pred_check
        %p159 = pneg %p71
      $region26: #{tpu_custom_call.1} parent=19 // pred_check_branch
        %161 = sbr.rel (%p159) target = $region28
      $region27: #{tpu_custom_call.1} parent=19 // pred_region
        %s162 = smul.u32 25, %s17
        %p163 = scmp.lt.s32.totalorder %s16, 1
        %s164 = scalar_select %p163, %s16, 1
        %p165 = scmp.lt.s32.totalorder %s162, 24
        %s166 = scalar_select %p165, %s162, 24
        %s167 = smul.addr %s164, 25
        %s168 = sadd.s32 %s166, %s167
        %s169 = smul.addr %s168, 4
        %s170 = scalar_lea.vmem %s1, %s169
        %s171 = smul.u32 25, %s17
      $region28: #{tpu_custom_call.1} parent=19 // pred_fallthru
        _
    $region20: #{tpu_custom_call.1} parent=5 // pred_fallthru
      _
    %p172 = scmp.le.s32.totalorder 1, %s9
    %p173 = scmp.lt.s32.totalorder %s9, 3
    %p174 = pnand %p172, %p173
    %p175 = pneg %p174
    // Predicated region
    $region29: #{tpu_custom_call.1} parent=5 // pred_check
      _
    $region30: #{tpu_custom_call.1} parent=5 // pred_check_branch
      %177 = sbr.rel (%p174) target = $region32
    $region31: #{tpu_custom_call.1} parent=5 // pred_region
      %s178 = ssub.s32 %s9, 1
      %s179 = smul.u32 25, %s19
      %p180 = scmp.lt.s32.totalorder %s18, 1
      %s181 = scalar_select %p180, %s18, 1
      %p182 = scmp.lt.s32.totalorder %s179, 24
      %s183 = scalar_select %p182, %s179, 24
      %s184 = smul.addr %s181, 25
      %s185 = sadd.s32 %s183, %s184
      %s186 = smul.addr %s185, 8
      %s187 = scalar_lea.vmem %s0, %s186
      %p188 = pneg %p49
      %p189 = pneg %p46
      %s190 = smul.u32 25, %s19
      %p191 = scmp.lt.s32.totalorder %s18, 1
      %s192 = scalar_select %p191, %s18, 1
      %p193 = scmp.lt.s32.totalorder %s190, 24
      %s194 = scalar_select %p193, %s190, 24
      %s195 = smul.addr %s192, 25
      %s196 = sadd.s32 %s194, %s195
      %s197 = smul.addr %s196, 4
      %s198 = scalar_lea.vmem %s1, %s197
      %p199 = pneg %p77
      %p200 = pneg %p74
      %p201 = pneg %p98
      %p202 = pneg %p95
      %p203 = pneg %p124
      %p204 = pneg %p121
      %p205 = scmp.lt.s32.totalorder %s18, 1
      %s206 = scalar_select %p205, %s18, 1
      %s207 = smul.addr %s206, 12
      %s208 = smul.addr %s207, 8
      %s209 = scalar_lea.vmem %s3, %s208
      %s210 = smul.u32 25, %s19
      %p211 = scmp.lt.s32.totalorder %s18, 1
      %s212 = scalar_select %p211, %s18, 1
      %p213 = scmp.lt.s32.totalorder %s210, 24
      %s214 = scalar_select %p213, %s210, 24
      %s215 = smul.addr %s212, 25
      %s216 = sadd.s32 %s214, %s215
      %s217 = smul.addr %s216, 8
      %s218 = scalar_lea.vmem %s0, %s217
      %s219 = smul.u32 25, %s19
      %s220 = smul.u32 25, %s19
      %p221 = scmp.lt.s32.totalorder %s18, 1
      %s222 = scalar_select %p221, %s18, 1
      %p223 = scmp.lt.s32.totalorder %s220, 24
      %s224 = scalar_select %p223, %s220, 24
      %s225 = smul.addr %s222, 25
      %s226 = sadd.s32 %s224, %s225
      %s227 = smul.addr %s226, 4
      %s228 = scalar_lea.vmem %s1, %s227
      %s229 = smul.u32 25, %s19
      %p230 = scmp.lt.s32.totalorder %s18, 1
      %s231 = scalar_select %p230, %s18, 1
      %s232 = smul.addr %s231, 12
      %s233 = smul.addr %s232, 8
      %s234 = scalar_lea.vmem %s3, %s233
      %p236 = scmp.eq.s32.totalorder %s19, 0
      // Predicated region
      $region33: #{tpu_custom_call.1} parent=31 // pred_check
        %p237 = pneg %p236
      $region34: #{tpu_custom_call.1} parent=31 // pred_check_branch
        %239 = sbr.rel (%p237) target = $region36
      $region35: #{tpu_custom_call.1} parent=31 // pred_region
        %vm240 = vcmask 778240
        %241 = vst.msk [vmem:[#allocation2] sm:$0x1] %vm240, 0.0
      $region36: #{tpu_custom_call.1} parent=31 // pred_fallthru
        _
      %v242 = vld [vmem:[%s228] sm:$0xf]
      %v243 = vld [vmem:[%s228 + $0x4] sm:$0xf]
      %v244 = vld [vmem:[%s228 + $0x8] sm:$0xf]
      %v245 = vld [vmem:[%s228 + $0xc] sm:$0xf]
      %v246 = vld [vmem:[%s228 + $0x10] sm:$0xf]
      %v247 = vld [vmem:[%s228 + $0x14] sm:$0xf]
      %v248 = vld [vmem:[%s228 + $0x18] sm:$0xf]
      %v249 = vld [vmem:[%s228 + $0x1c] sm:$0xf]
      %v250 = vld [vmem:[%s228 + $0x20] sm:$0xf]
      %v251 = vld [vmem:[%s228 + $0x24] sm:$0xf]
      %v252 = vld [vmem:[%s228 + $0x28] sm:$0xf]
      %v253 = vld [vmem:[%s228 + $0x2c] sm:$0xf]
      %v254 = vld [vmem:[%s228 + $0x30] sm:$0xf]
      %v255 = vld [vmem:[%s228 + $0x34] sm:$0xf]
      %v256 = vld [vmem:[%s228 + $0x38] sm:$0xf]
      %v257 = vld [vmem:[%s228 + $0x3c] sm:$0xf]
      %v258 = vld [vmem:[%s228 + $0x40] sm:$0xf]
      %v259 = vld [vmem:[%s228 + $0x44] sm:$0xf]
      %v260 = vld [vmem:[%s228 + $0x48] sm:$0xf]
      %v261 = vld [vmem:[%s228 + $0x4c] sm:$0xf]
      %v262 = vld [vmem:[%s228 + $0x50] sm:$0xf]
      %v263 = vld [vmem:[%s228 + $0x54] sm:$0xf]
      %v264 = vld [vmem:[%s228 + $0x58] sm:$0xf]
      %v265 = vld [vmem:[%s228 + $0x5c] sm:$0xf]
      %v266 = vld [vmem:[%s228 + $0x60] sm:$0xf]
      %v267 = vunpack.c.l.bf16 %v242
      %v268 = vunpack.c.l.bf16 %v243
      %v269 = vunpack.c.l.bf16 %v244
      %v270 = vunpack.c.l.bf16 %v245
      %v271 = vunpack.c.l.bf16 %v246
      %v272 = vunpack.c.l.bf16 %v247
      %v273 = vunpack.c.l.bf16 %v248
      %v274 = vunpack.c.l.bf16 %v249
      %v275 = vunpack.c.l.bf16 %v250
      %v276 = vunpack.c.l.bf16 %v251
      %v277 = vunpack.c.l.bf16 %v252
      %v278 = vunpack.c.l.bf16 %v253
      %v279 = vunpack.c.l.bf16 %v254
      %v280 = vunpack.c.l.bf16 %v255
      %v281 = vunpack.c.l.bf16 %v256
      %v282 = vunpack.c.l.bf16 %v257
      %v283 = vunpack.c.l.bf16 %v258
      %v284 = vunpack.c.l.bf16 %v259
      %v285 = vunpack.c.l.bf16 %v260
      %v286 = vunpack.c.l.bf16 %v261
      %v287 = vunpack.c.l.bf16 %v262
      %v288 = vunpack.c.l.bf16 %v263
      %v289 = vunpack.c.l.bf16 %v264
      %v290 = vunpack.c.l.bf16 %v265
      %v291 = vunpack.c.l.bf16 %v266
      %v292 = vld [vmem:[#allocation2] sm:$0x1]
      %v293 = vld [vmem:[%s218] sm:$0xff]
      %v294 = vld [vmem:[%s218 + $0x8] sm:$0xff]
      %v295 = vld [vmem:[%s218 + $0x10] sm:$0xff]
      %v296 = vld [vmem:[%s218 + $0x18] sm:$0xff]
      %v297 = vld [vmem:[%s218 + $0x20] sm:$0xff]
      %v298 = vld [vmem:[%s218 + $0x28] sm:$0xff]
      %v299 = vld [vmem:[%s218 + $0x30] sm:$0xff]
      %v300 = vld [vmem:[%s218 + $0x38] sm:$0xff]
      %v301 = vld [vmem:[%s218 + $0x40] sm:$0xff]
      %v302 = vld [vmem:[%s218 + $0x48] sm:$0xff]
      %v303 = vld [vmem:[%s218 + $0x50] sm:$0xff]
      %v304 = vld [vmem:[%s218 + $0x58] sm:$0xff]
      %v305 = vld [vmem:[%s218 + $0x60] sm:$0xff]
      %v306 = vld [vmem:[%s218 + $0x68] sm:$0xff]
      %v307 = vld [vmem:[%s218 + $0x70] sm:$0xff]
      %v308 = vld [vmem:[%s218 + $0x78] sm:$0xff]
      %v309 = vld [vmem:[%s218 + $0x80] sm:$0xff]
      %v310 = vld [vmem:[%s218 + $0x88] sm:$0xff]
      %v311 = vld [vmem:[%s218 + $0x90] sm:$0xff]
      %v312 = vld [vmem:[%s218 + $0x98] sm:$0xff]
      %v313 = vld [vmem:[%s218 + $0xa0] sm:$0xff]
      %v314 = vld [vmem:[%s218 + $0xa8] sm:$0xff]
      %v315 = vld [vmem:[%s218 + $0xb0] sm:$0xff]
      %v316 = vld [vmem:[%s218 + $0xb8] sm:$0xff]
      %v317 = vld [vmem:[%s218 + $0xc0] sm:$0xff]
      %319 = vset.pattern.permute.xlu0 0
      %320 = vperm.xlu0 %319, %v293
      %v321 = vpop.permute.xlu0 %320
      %324 = vset.pattern.permute.xlu0 0
      %325 = vperm.xlu0 %324, %v294
      %v326 = vpop.permute.xlu0 %325
      %329 = vset.pattern.permute.xlu0 0
      %330 = vperm.xlu0 %329, %v295
      %v331 = vpop.permute.xlu0 %330
      %334 = vset.pattern.permute.xlu0 0
      %335 = vperm.xlu0 %334, %v296
      %v336 = vpop.permute.xlu0 %335
      %339 = vset.pattern.permute.xlu0 0
      %340 = vperm.xlu0 %339, %v297
      %v341 = vpop.permute.xlu0 %340
      %344 = vset.pattern.permute.xlu0 0
      %345 = vperm.xlu0 %344, %v298
      %v346 = vpop.permute.xlu0 %345
      %349 = vset.pattern.permute.xlu0 0
      %350 = vperm.xlu0 %349, %v299
      %v351 = vpop.permute.xlu0 %350
      %354 = vset.pattern.permute.xlu0 0
      %355 = vperm.xlu0 %354, %v300
      %v356 = vpop.permute.xlu0 %355
      %359 = vset.pattern.permute.xlu0 0
      %360 = vperm.xlu0 %359, %v301
      %v361 = vpop.permute.xlu0 %360
      %364 = vset.pattern.permute.xlu0 0
      %365 = vperm.xlu0 %364, %v302
      %v366 = vpop.permute.xlu0 %365
      %369 = vset.pattern.permute.xlu0 0
      %370 = vperm.xlu0 %369, %v303
      %v371 = vpop.permute.xlu0 %370
      %374 = vset.pattern.permute.xlu0 0
      %375 = vperm.xlu0 %374, %v304
      %v376 = vpop.permute.xlu0 %375
      %379 = vset.pattern.permute.xlu0 0
      %380 = vperm.xlu0 %379, %v305
      %v381 = vpop.permute.xlu0 %380
      %384 = vset.pattern.permute.xlu0 0
      %385 = vperm.xlu0 %384, %v306
      %v386 = vpop.permute.xlu0 %385
      %389 = vset.pattern.permute.xlu0 0
      %390 = vperm.xlu0 %389, %v307
      %v391 = vpop.permute.xlu0 %390
      %394 = vset.pattern.permute.xlu0 0
      %395 = vperm.xlu0 %394, %v308
      %v396 = vpop.permute.xlu0 %395
      %399 = vset.pattern.permute.xlu0 0
      %400 = vperm.xlu0 %399, %v309
      %v401 = vpop.permute.xlu0 %400
      %404 = vset.pattern.permute.xlu0 0
      %405 = vperm.xlu0 %404, %v310
      %v406 = vpop.permute.xlu0 %405
      %409 = vset.pattern.permute.xlu0 0
      %410 = vperm.xlu0 %409, %v311
      %v411 = vpop.permute.xlu0 %410
      %414 = vset.pattern.permute.xlu0 0
      %415 = vperm.xlu0 %414, %v312
      %v416 = vpop.permute.xlu0 %415
      %419 = vset.pattern.permute.xlu0 0
      %420 = vperm.xlu0 %419, %v313
      %v421 = vpop.permute.xlu0 %420
      %424 = vset.pattern.permute.xlu0 0
      %425 = vperm.xlu0 %424, %v314
      %v426 = vpop.permute.xlu0 %425
      %429 = vset.pattern.permute.xlu0 0
      %430 = vperm.xlu0 %429, %v315
      %v431 = vpop.permute.xlu0 %430
      %434 = vset.pattern.permute.xlu0 0
      %435 = vperm.xlu0 %434, %v316
      %v436 = vpop.permute.xlu0 %435
      %439 = vset.pattern.permute.xlu0 0
      %440 = vperm.xlu0 %439, %v317
      %v441 = vpop.permute.xlu0 %440
      %v443 = vmul.f32 %v267, %v321
      %v444 = vmul.f32 %v268, %v326
      %v445 = vmul.f32 %v269, %v331
      %v446 = vmul.f32 %v270, %v336
      %v447 = vmul.f32 %v271, %v341
      %v448 = vmul.f32 %v272, %v346
      %v449 = vmul.f32 %v273, %v351
      %v450 = vmul.f32 %v274, %v356
      %v451 = vmul.f32 %v275, %v361
      %v452 = vmul.f32 %v276, %v366
      %v453 = vmul.f32 %v277, %v371
      %v454 = vmul.f32 %v278, %v376
      %v455 = vmul.f32 %v279, %v381
      %v456 = vmul.f32 %v280, %v386
      %v457 = vmul.f32 %v281, %v391
      %v458 = vmul.f32 %v282, %v396
      %v459 = vmul.f32 %v283, %v401
      %v460 = vmul.f32 %v284, %v406
      %v461 = vmul.f32 %v285, %v411
      %v462 = vmul.f32 %v286, %v416
      %v463 = vmul.f32 %v287, %v421
      %v464 = vmul.f32 %v288, %v426
      %v465 = vmul.f32 %v289, %v431
      %v466 = vmul.f32 %v290, %v436
      %v467 = vmul.f32 %v291, %v441
      %vm468 = vcmask 785408
      %v469 = vsel %vm468, %v443, 0.0
      %v470 = vsel %vm468, %v444, 0.0
      %v471 = vadd.f32 %v469, %v470
      %v472 = vsel %vm468, %v445, 0.0
      %v473 = vadd.f32 %v471, %v472
      %v474 = vsel %vm468, %v446, 0.0
      %v475 = vadd.f32 %v473, %v474
      %v476 = vsel %vm468, %v447, 0.0
      %v477 = vadd.f32 %v475, %v476
      %v478 = vsel %vm468, %v448, 0.0
      %v479 = vadd.f32 %v477, %v478
      %v480 = vsel %vm468, %v449, 0.0
      %v481 = vadd.f32 %v479, %v480
      %v482 = vsel %vm468, %v450, 0.0
      %v483 = vadd.f32 %v481, %v482
      %v484 = vsel %vm468, %v451, 0.0
      %v485 = vadd.f32 %v483, %v484
      %v486 = vsel %vm468, %v452, 0.0
      %v487 = vadd.f32 %v485, %v486
      %v488 = vsel %vm468, %v453, 0.0
      %v489 = vadd.f32 %v487, %v488
      %v490 = vsel %vm468, %v454, 0.0
      %v491 = vadd.f32 %v489, %v490
      %v492 = vsel %vm468, %v455, 0.0
      %v493 = vadd.f32 %v491, %v492
      %v494 = vsel %vm468, %v456, 0.0
      %v495 = vadd.f32 %v493, %v494
      %v496 = vsel %vm468, %v457, 0.0
      %v497 = vadd.f32 %v495, %v496
      %v498 = vsel %vm468, %v458, 0.0
      %v499 = vadd.f32 %v497, %v498
      %v500 = vsel %vm468, %v459, 0.0
      %v501 = vadd.f32 %v499, %v500
      %v502 = vsel %vm468, %v460, 0.0
      %v503 = vadd.f32 %v501, %v502
      %v504 = vsel %vm468, %v461, 0.0
      %v505 = vadd.f32 %v503, %v504
      %v506 = vsel %vm468, %v462, 0.0
      %v507 = vadd.f32 %v505, %v506
      %v508 = vsel %vm468, %v463, 0.0
      %v509 = vadd.f32 %v507, %v508
      %v510 = vsel %vm468, %v464, 0.0
      %v511 = vadd.f32 %v509, %v510
      %v512 = vsel %vm468, %v465, 0.0
      %v513 = vadd.f32 %v511, %v512
      %v514 = vsel %vm468, %v466, 0.0
      %v515 = vadd.f32 %v513, %v514
      %v516 = vsel %vm468, %v467, 0.0
      %v517 = vadd.f32 %v515, %v516
      %v518 = vrot.slane %v517, 4
      %v519 = vadd.f32 %v517, %v518
      %v520 = vrot.slane %v519, 2
      %v521 = vadd.f32 %v519, %v520
      %v522 = vrot.slane %v521, 1
      %v523 = vadd.f32 %v521, %v522
      %v524 = vadd.f32 %v292, %v523
      %vm525 = vcmask 778240
      %526 = vst.msk [vmem:[#allocation2] sm:$0x1] %vm525, %v524
      // Predicated region
      $region37: #{tpu_custom_call.1} parent=31 // pred_check
        %p527 = pneg %p236
      $region38: #{tpu_custom_call.1} parent=31 // pred_check_branch
        %529 = sbr.rel (%p527) target = $region40
      $region39: #{tpu_custom_call.1} parent=31 // pred_region
        %v530 = vld [vmem:[#allocation2] sm:$0x1]
        %v531 = vxor.u32 %v530, 2147483648
        %v532 = vmul.f32 %v531, 1.442695
        %v533 = vpow.pop %v532
        %v534 = vadd.f32 %v533, 1.0
        %v535 = vrcp.pop %v534
        %v536 = vmul.f32 1.0, %v535
        %v537 = vpack.c.bf16 %v536, %v536
        %v538 = vld [vmem:[%s2] sm:$0xf]
        %v539 = vld [vmem:[%s2 + $0x4] sm:$0xf]
        %v540 = vld [vmem:[%s2 + $0x8] sm:$0xf]
        %v541 = vld [vmem:[%s2 + $0xc] sm:$0xf]
        %v542 = vld [vmem:[%s2 + $0x10] sm:$0xf]
        %v543 = vld [vmem:[%s2 + $0x14] sm:$0xf]
        %v544 = vld [vmem:[%s2 + $0x18] sm:$0xf]
        %v545 = vld [vmem:[%s2 + $0x1c] sm:$0xf]
        %v546 = vld [vmem:[%s2 + $0x20] sm:$0xf]
        %v547 = vld [vmem:[%s2 + $0x24] sm:$0xf]
        %v548 = vld [vmem:[%s2 + $0x28] sm:$0xf]
        %v549 = vld [vmem:[%s2 + $0x2c] sm:$0xf]
        %v562 = vunpack.c.l.b16 %v538
        %v563 = vunpack.c.l.b16 %v539
        %v564 = vunpack.c.l.b16 %v540
        %v565 = vunpack.c.l.b16 %v541
        %v566 = vunpack.c.l.b16 %v542
        %v567 = vunpack.c.l.b16 %v543
        %v568 = vunpack.c.l.b16 %v544
        %v569 = vunpack.c.l.b16 %v545
        %v570 = vunpack.c.l.b16 %v546
        %v571 = vunpack.c.l.b16 %v547
        %v572 = vunpack.c.l.b16 %v548
        %v573 = vunpack.c.l.b16 %v549
        %v574 = vpack.c.b16 %v563, %v562
        %v575 = vpack.c.b16 %v565, %v564
        %v576 = vpack.c.b16 %v567, %v566
        %v577 = vpack.c.b16 %v569, %v568
        %v578 = vpack.c.b16 %v571, %v570
        %v579 = vpack.c.b16 %v573, %v572
        %v587 = vsel %vm468, %v537, 0
        %589 = vmatprep.subr.bf16.mxu0 0
        %590 = vmatpush1.bf16.msra.mxu0 0
        %591 = vmatprep.subr.bf16.mxu0 0
        %592 = vmatpush1.bf16.msra.mxu0 0
        %593 = vmatprep.subr.bf16.mxu0 0
        %594 = vmatpush1.bf16.msra.mxu0 %v579
        %595 = vmatprep.subr.bf16.mxu0 0
        %596 = vmatpush1.bf16.msra.mxu0 %v578
        %597 = vmatprep.subr.bf16.mxu0 0
        %598 = vmatpush1.bf16.msra.mxu0 %v577
        %599 = vmatprep.subr.bf16.mxu0 0
        %600 = vmatpush1.bf16.msra.mxu0 %v576
        %601 = vmatprep.subr.bf16.mxu0 0
        %602 = vmatpush1.bf16.msra.mxu0 %v575
        %603 = vmatprep.subr.bf16.mxu0 0
        %604 = vmatpush1.bf16.msra.mxu0 %v574
        %605 = vmatprep.subr.bf16.mxu0 0
        %606 = vmatpush2.bf16.msra.mxu0 0
        %607 = vmatprep.subr.bf16.mxu0 0
        %608 = vmatpush2.bf16.msra.mxu0 0
        %609 = vmatprep.subr.bf16.mxu0 0
        %610 = vmatpush2.bf16.msra.mxu0 0
        %611 = vmatprep.subr.bf16.mxu0 0
        %612 = vmatpush2.bf16.msra.mxu0 0
        %613 = vmatprep.subr.bf16.mxu0 0
        %614 = vmatpush2.bf16.msra.mxu0 0
        %615 = vmatprep.subr.bf16.mxu0 0
        %616 = vmatpush2.bf16.msra.mxu0 0
        %617 = vmatprep.subr.bf16.mxu0 0
        %618 = vmatpush2.bf16.msra.mxu0 0
        %619 = vmatprep.subr.bf16.mxu0 0
        %620 = vmatpush2.bf16.msra.mxu0 0
        %621 = vmatprep.mubr.bf16.mxu0 0
        %622 = vmatmul.mubr.bf16.gmra.mxu0 %v587
        %v623 = vpop.f32.mrf.mxu0
        %v624 = vadd.f32 0.0, %v623
        %v625 = vpop.f32.mrf.mxu0
        %v626 = vpop.f32.mrf.mxu0
        %v627 = vpop.f32.mrf.mxu0
        %628 = vdwg.mxu0
        %629 = vxpose.xlu0.b32.start [1/16] %v624, 128
        %630 = vxpose.xlu0.b32.cont [2/16] 0.0, 128
        %631 = vxpose.xlu0.b32.cont [3/16] 0.0, 128
        %632 = vxpose.xlu0.b32.cont [4/16] 0.0, 128
        %633 = vxpose.xlu0.b32.cont [5/16] 0.0, 128
        %634 = vxpose.xlu0.b32.cont [6/16] 0.0, 128
        %635 = vxpose.xlu0.b32.cont [7/16] 0.0, 128
        %636 = vxpose.xlu0.b32.cont [8/16] 0.0, 128
        %637 = vxpose.xlu0.b32.cont [9/16] 0.0, 128
        %638 = vxpose.xlu0.b32.cont [10/16] 0.0, 128
        %639 = vxpose.xlu0.b32.cont [11/16] 0.0, 128
        %640 = vxpose.xlu0.b32.cont [12/16] 0.0, 128
        %641 = vxpose.xlu0.b32.cont [13/16] 0.0, 128
        %642 = vxpose.xlu0.b32.cont [14/16] 0.0, 128
        %643 = vxpose.xlu0.b32.cont [15/16] 0.0, 128
        %644 = vxpose.xlu0.b32.end [16/16] 0.0, 128
        %v645 = vpop.trf.xlu0
        %v646 = vpop.trf.xlu0
        %v647 = vpop.trf.xlu0
        %v648 = vpop.trf.xlu0
        %v649 = vpop.trf.xlu0
        %v650 = vpop.trf.xlu0
        %v651 = vpop.trf.xlu0
        %v652 = vpop.trf.xlu0
        %v653 = vpop.trf.xlu0
        %v654 = vpop.trf.xlu0
        %v655 = vpop.trf.xlu0
        %v656 = vpop.trf.xlu0
        %v657 = vpop.trf.xlu0
        %v658 = vpop.trf.xlu0
        %v659 = vpop.trf.xlu0
        %v660 = vpop.trf.xlu0
        %vm661 = vcmask 7168
        %662 = vst.msk [vmem:[%s234] sm:$0xff] %vm661, %v645
        %663 = vst.msk [vmem:[%s234 + $0x8] sm:$0xff] %vm661, %v646
        %664 = vst.msk [vmem:[%s234 + $0x10] sm:$0xff] %vm661, %v647
        %665 = vst.msk [vmem:[%s234 + $0x18] sm:$0xff] %vm661, %v648
        %666 = vst.msk [vmem:[%s234 + $0x20] sm:$0xff] %vm661, %v649
        %667 = vst.msk [vmem:[%s234 + $0x28] sm:$0xff] %vm661, %v650
        %668 = vst.msk [vmem:[%s234 + $0x30] sm:$0xff] %vm661, %v651
        %669 = vst.msk [vmem:[%s234 + $0x38] sm:$0xff] %vm661, %v652
        %670 = vst.msk [vmem:[%s234 + $0x40] sm:$0xff] %vm661, %v653
        %671 = vst.msk [vmem:[%s234 + $0x48] sm:$0xff] %vm661, %v654
        %672 = vst.msk [vmem:[%s234 + $0x50] sm:$0xff] %vm661, %v655
        %673 = vst.msk [vmem:[%s234 + $0x58] sm:$0xff] %vm661, %v656
      $region40: #{tpu_custom_call.1} parent=31 // pred_fallthru
        _
      %p674 = scmp.lt.s32.totalorder %s18, 1
      %s675 = scalar_select %p674, %s18, 1
      %s676 = smul.addr %s675, 12
      %s677 = smul.addr %s676, 8
      %s678 = scalar_lea.vmem %s3, %s677
      // Predicated region
      $region41: #{tpu_custom_call.1} parent=31 // pred_check
        %p679 = pneg %p121
      $region42: #{tpu_custom_call.1} parent=31 // pred_check_branch
        %681 = sbr.rel (%p679) target = $region44
      $region43: #{tpu_custom_call.1} parent=31 // pred_region
        _
      $region44: #{tpu_custom_call.1} parent=31 // pred_fallthru
        _
    $region32: #{tpu_custom_call.1} parent=5 // pred_fallthru
      _
    %p682 = scmp.le.s32.totalorder 2, %s9
    // Predicated region
    $region45: #{tpu_custom_call.1} parent=5 // pred_check
      %p683 = pneg %p682
    $region46: #{tpu_custom_call.1} parent=5 // pred_check_branch
      %685 = sbr.rel (%p683) target = $region48
    $region47: #{tpu_custom_call.1} parent=5 // pred_region
      %s686 = ssub.s32 %s9, 2
      // Predicated region
      $region49: #{tpu_custom_call.1} parent=47 // pred_check
        %p687 = pneg %p127
      $region50: #{tpu_custom_call.1} parent=47 // pred_check_branch
        %689 = sbr.rel (%p687) target = $region52
      $region51: #{tpu_custom_call.1} parent=47 // pred_region
        %p690 = scmp.lt.s32.totalorder %s20, 1
        %s691 = scalar_select %p690, %s20, 1
        %s692 = smul.addr %s691, 12
        %s693 = smul.addr %s692, 8
        %s694 = scalar_lea.vmem %s3, %s693
      $region52: #{tpu_custom_call.1} parent=47 // pred_fallthru
        _
    $region48: #{tpu_custom_call.1} parent=5 // pred_fallthru
      _
  $region6: #{tpu_custom_call.1} parent=0 // loop_footer
    %s13 = sadd.s32 1, %s9
  $region7: #{tpu_custom_call.1} parent=0 // loop_footer_branch
    %8 = sbr.rel target = $region3
  $region8: #{tpu_custom_call.1} parent=0 // loop_exit
    _

</llo_original>
